<compile_context>
chip_gen: v6e
topology: v6e:2x2x1
jax: 0.10.0
libtpu: 0.0.40
codegen_flags: <defaults>
</compile_context>

<pallas_src>
import functools

import jax
import jax.numpy as jnp
from jax.experimental import pallas as pl
from jax.experimental.pallas import tpu as pltpu


def _round_up(x, m):
    return ((x + m - 1) // m) * m


def _vmem_capacity_bytes():
    try:
        return int(pltpu.get_tpu_info().vmem_capacity_bytes)
    except Exception:
        return 128 * 1024 * 1024


def _num_tensorcores():
    # Best-effort TensorCores-per-chip (2 on v7x, 1 on v5e/v6e).
    try:
        info = pltpu.get_tpu_info()
        for name in ("num_cores", "core_count", "num_tensorcores",
                     "num_tensor_cores", "tensorcores_per_chip",
                     "cores_per_chip"):
            v = getattr(info, name, None)
            if v is not None:
                v = int(v)
                if v > 0:
                    return v
    except Exception:
        pass
    try:
        d = jax.devices()[0]
        for name in ("num_cores", "core_count"):
            v = getattr(d, name, None)
            if v is not None:
                v = int(v)
                if v > 0:
                    return v
    except Exception:
        pass
    return 2  # conservative: keep the megacore split on unknown parts


# A (TILE_N, 1) int32 block lane-pads to 128 lanes * 4 B = 512 B per VMEM row.
_TGT_VMEM_ROW_BYTES = 512


def _pick_tile_n(n, c, itemsize):
    # Per double-buffered copy: logits row bytes (actual dtype) + lane-padded
    # targets row.  ~8 MiB per copy; ~4 MiB on 64 MiB-VMEM chips (v7x).
    budget = 8 * 1024 * 1024
    if _vmem_capacity_bytes() <= 64 * 1024 * 1024:
        budget = 4 * 1024 * 1024
    per_row = itemsize * c + _TGT_VMEM_ROW_BYTES
    tile = max(8, (budget // per_row) // 8 * 8)
    return min(tile, _round_up(n, 8))


def _focal_loss_kernel(logits_ref, targets_ref, out_ref, *,
                       alpha, gamma, n_total, tile_n, tiles_per_split,
                       may_have_padding):
    p = pl.program_id(0)          # parallel split (one per TensorCore on v7x)
    k = pl.program_id(1)          # streaming reduction over row tiles

    @pl.when(k == 0)
    def _():
        out_ref[...] = jnp.zeros_like(out_ref)

    logits = logits_ref[...].astype(jnp.float32)            # (TILE_N, C)
    tgt = targets_ref[...]                                   # (TILE_N, 1) int32
    tn, c = logits.shape

    # Row max: the only cross-lane (XLU) reduce left per logits vreg.
    m = jnp.max(logits, axis=-1, keepdims=True)              # (TILE_N, 1)

    # The two other lane reductions ride the otherwise idle MXU as
    # dot-with-ones.  Operands are split into exactly-representable bf16
    # hi/lo parts so this is the native bf16 MXU path with ~f32 accuracy.
    ones = jnp.ones((c, 128), dtype=jnp.bfloat16)

    def mxu_row_sum(x):                                       # (TILE_N, C) -> (TILE_N, 1)
        hi = x.astype(jnp.bfloat16)
        lo = (x - hi.astype(jnp.float32)).astype(jnp.bfloat16)
        s = (jnp.dot(hi, ones, preferred_element_type=jnp.float32)
             + jnp.dot(lo, ones, preferred_element_type=jnp.float32))
        return s[:, :1]                                       # all 128 lanes identical

    e = jnp.exp(logits - m)                                   # (TILE_N, C) EUP
    sum_e = mxu_row_sum(e)                                    # (TILE_N, 1)

    col_ids = jax.lax.broadcasted_iota(jnp.int32, (tn, c), 1)
    sel = jnp.where(col_ids == tgt, logits, 0.0)
    tgt_logit = mxu_row_sum(sel)                              # (TILE_N, 1)

    # cross_entropy(reduction='none') per row: logsumexp(logits) - logits[target]
    ce = (m + jnp.log(sum_e)) - tgt_logit                     # (TILE_N, 1)
    pt = jnp.exp(-ce)
    one_m_pt = 1.0 - pt
    if float(gamma) == 2.0:
        mod = jnp.square(one_m_pt)            # VPU mul, not pow (log+exp on EUP)
    elif float(gamma) == int(gamma):
        mod = one_m_pt ** int(gamma)          # integer_pow multiply chain
    else:
        mod = one_m_pt ** jnp.float32(gamma)
    focal = alpha * mod * ce                                  # (TILE_N, 1)

    # Steady state: tree-reduce this tile's contribution to a scalar and
    # accumulate into the resident lane-dense output block.  Padded-row
    # masking only runs on tiles that can actually contain rows >= N.
    if may_have_padding:
        row0 = (p * tiles_per_split + k) * tile_n
        needs_mask = row0 + tile_n > n_total

        @pl.when(needs_mask)
        def _():
            row_ids = row0 + jax.lax.broadcasted_iota(jnp.int32, (tn, 1), 0)
            masked = jnp.where(row_ids < n_total, focal, 0.0)
            out_ref[...] += jnp.sum(masked)

        @pl.when(jnp.logical_not(needs_mask))
        def _():
            out_ref[...] += jnp.sum(focal)
    else:
        out_ref[...] += jnp.sum(focal)


def focal_loss(logits, targets, alpha=0.25, gamma=2.0, tile_n=None):
    """logits: [N, C] (f32 or bf16); targets: [N] int. Returns scalar f32 mean focal loss."""
    n, c = logits.shape
    itemsize = jnp.dtype(logits.dtype).itemsize
    if tile_n is None:
        tile_n = _pick_tile_n(n, c, itemsize)
    assert tile_n % 8 == 0

    num_tiles = pl.cdiv(n, tile_n)
    num_splits = min(2, _num_tensorcores()) if num_tiles >= 2 else 1
    num_splits = max(1, num_splits)
    num_tiles = _round_up(num_tiles, num_splits)
    tiles_per_split = num_tiles // num_splits
    n_pad = num_tiles * tile_n

    targets2d = targets.astype(jnp.int32).reshape(n, 1)
    if n_pad != n:
        logits = jnp.pad(logits, ((0, n_pad - n), (0, 0)))
        targets2d = jnp.pad(targets2d, ((0, n_pad - n), (0, 0)))

    kernel = functools.partial(
        _focal_loss_kernel, alpha=float(alpha), gamma=float(gamma),
        n_total=n, tile_n=tile_n, tiles_per_split=tiles_per_split,
        may_have_padding=(n_pad != n))

    small_vmem = _vmem_capacity_bytes() <= 64 * 1024 * 1024
    vmem_limit = (40 if small_vmem else 64) * 1024 * 1024

    bytes_in = itemsize * n_pad * c + 4 * n_pad
    cost = pl.CostEstimate(flops=10 * n_pad * c,
                           transcendentals=n_pad * (c + 3),
                           bytes_accessed=bytes_in + 4 * num_splits * 8 * 128)

    partials = pl.pallas_call(
        kernel,
        out_shape=jax.ShapeDtypeStruct((num_splits * 8, 128), jnp.float32),
        grid_spec=pltpu.PrefetchScalarGridSpec(
            num_scalar_prefetch=0,
            grid=(num_splits, tiles_per_split),
            in_specs=[
                pl.BlockSpec((tile_n, c),
                             lambda p, k: (p * tiles_per_split + k, 0)),
                pl.BlockSpec((tile_n, 1),
                             lambda p, k: (p * tiles_per_split + k, 0)),
            ],
            out_specs=pl.BlockSpec((8, 128), lambda p, k: (p, 0)),
        ),
        compiler_params=pltpu.CompilerParams(
            dimension_semantics=("parallel", "arbitrary"),
            vmem_limit_bytes=vmem_limit,
        ),
        cost_estimate=cost,
    )(logits, targets2d)

    # Each (8, 128) split block holds that split's partial sum replicated.
    return partials.reshape(num_splits, 8 * 128)[:, 0].sum() / jnp.float32(n)


def _reference_focal_loss(logits, targets, alpha=0.25, gamma=2.0):
    logp = jax.nn.log_softmax(logits.astype(jnp.float32), axis=-1)
    ce = -jnp.take_along_axis(logp, targets[:, None], axis=-1)[:, 0]
    pt = jnp.exp(-ce)
    return jnp.mean(alpha * (1.0 - pt) ** gamma * ce)


if __name__ == "__main__":
    key = jax.random.PRNGKey(0)
    k1, k2, k3, k4 = jax.random.split(key, 4)

    # Small shapes consistent with the module: a batch of logits over C classes.
    N, C = 8, 32
    logits = jax.random.normal(k1, (N, C), dtype=jnp.float32)
    targets = jax.random.randint(k2, (N,), 0, C, dtype=jnp.int32)

    loss = focal_loss(logits, targets)
    jax.block_until_ready(loss)
    ref = _reference_focal_loss(logits, targets)
    assert jnp.allclose(loss, ref, atol=2e-5, rtol=2e-5), (loss, ref)

    # Exercise the pipelined multi-tile path (splits x tiles, padded + masked
    # rows, both pl.when accumulate arms).
    N2, C2 = 200, 32
    logits2 = jax.random.normal(k3, (N2, C2), dtype=jnp.float32)
    targets2 = jax.random.randint(k4, (N2,), 0, C2, dtype=jnp.int32)
    loss2 = focal_loss(logits2, targets2, tile_n=64)
    jax.block_until_ready(loss2)
    ref2 = _reference_focal_loss(logits2, targets2)
    assert jnp.allclose(loss2, ref2, atol=2e-5, rtol=2e-5), (loss2, ref2)

    print("KERNEL_OK")
</pallas_src>

<mosaic_0001>
module attributes {stable_mosaic.version = 11 : i64} {
  func.func @_focal_loss_kernel(%arg0: i32, %arg1: i32, %arg2: memref<8x32xf32, #tpu.memory_space<vmem>>, %arg3: memref<8x1xi32, #tpu.memory_space<vmem>>, %arg4: memref<8x128xf32, #tpu.memory_space<vmem>>) attributes {dimension_semantics = [#tpu.dimension_semantics<parallel>, #tpu.dimension_semantics<arbitrary>], iteration_bounds = array<i64: 1, 1>, scalar_prefetch = 0 : i64, scratch_operands = 0 : i64, tpu.core_type = #tpu.core_type<tc>, window_params = [{transform_indices = @transform_0, window_bounds = array<i64: 8, 32>}, {transform_indices = @transform_1, window_bounds = array<i64: 8, 1>}, {transform_indices = @transform_2, window_bounds = array<i64: 8, 128>}]} {
    %c0_i32 = arith.constant 0 : i32
    %0 = arith.cmpi eq, %arg1, %c0_i32 : i32
    %1 = arith.extui %0 : i1 to i32
    %c0_i32_0 = arith.constant 0 : i32
    %2 = arith.cmpi ne, %1, %c0_i32_0 : i32
    scf.if %2 {
      %cst_18 = arith.constant 0.000000e+00 : f32
      %52 = vector.broadcast %cst_18 : f32 to vector<8x128xf32>
      %c0_19 = arith.constant 0 : index
      %c0_20 = arith.constant 0 : index
      %53 = vector.load %arg4[%c0_19, %c0_20] : memref<8x128xf32, #tpu.memory_space<vmem>>, vector<8x128xf32>
      tpu.vector_store %arg4[%c0_19, %c0_20], %52 {strides = array<i32>} : memref<8x128xf32, #tpu.memory_space<vmem>>, vector<8x128xf32>,
    } else {
    }
    %c0 = arith.constant 0 : index
    %c0_1 = arith.constant 0 : index
    %3 = vector.load %arg2[%c0, %c0_1] : memref<8x32xf32, #tpu.memory_space<vmem>>, vector<8x32xf32>
    %c0_2 = arith.constant 0 : index
    %c0_3 = arith.constant 0 : index
    %4 = vector.load %arg3[%c0_2, %c0_3] : memref<8x1xi32, #tpu.memory_space<vmem>>, vector<8x1xi32>
    %cst = arith.constant dense<0xFF800000> : vector<8xf32>
    %5 = vector.multi_reduction <maximumf>, %3, %cst [1] : vector<8x32xf32> to vector<8xf32>
    %6 = vector.shape_cast %5 : vector<8xf32> to vector<8x1xf32>
    %cst_4 = arith.constant 1.000000e+00 : bf16
    %7 = vector.broadcast %cst_4 : bf16 to vector<32x128xbf16>
    %8 = vector.broadcast %6 : vector<8x1xf32> to vector<8x32xf32>
    %9 = arith.subf %3, %8 : vector<8x32xf32>
    %10 = math.exp %9 : vector<8x32xf32>
    %11 = arith.truncf %10 : vector<8x32xf32> to vector<8x32xbf16>
    %12 = arith.extf %11 : vector<8x32xbf16> to vector<8x32xf32>
    %13 = arith.subf %10, %12 : vector<8x32xf32>
    %14 = arith.truncf %13 : vector<8x32xf32> to vector<8x32xbf16>
    %cst_5 = arith.constant dense<0.000000e+00> : vector<8x128xf32>
    %15 = tpu.matmul %11, %7, %cst_5 {dimension_numbers = #tpu.dot_dimension_numbers<[1], [0], [0], [1], [0, 0, 1, 1], [], []>} : vector<8x32xbf16>, vector<32x128xbf16>, vector<8x128xf32> -> vector<8x128xf32>
    %cst_6 = arith.constant dense<0.000000e+00> : vector<8x128xf32>
    %16 = tpu.matmul %14, %7, %cst_6 {dimension_numbers = #tpu.dot_dimension_numbers<[1], [0], [0], [1], [0, 0, 1, 1], [], []>} : vector<8x32xbf16>, vector<32x128xbf16>, vector<8x128xf32> -> vector<8x128xf32>
    %17 = arith.addf %15, %16 : vector<8x128xf32>
    %18 = vector.extract_strided_slice %17 {offsets = [0, 0], sizes = [8, 1], strides = [1, 1]} : vector<8x128xf32> to vector<8x1xf32>
    %19 = tpu.iota {dimensions = array<i32: 1>} : vector<8x32xi32>
    %20 = vector.broadcast %4 : vector<8x1xi32> to vector<8x32xi32>
    %21 = arith.cmpi eq, %19, %20 : vector<8x32xi32>
    %cst_7 = arith.constant 0.000000e+00 : f32
    %22 = vector.broadcast %cst_7 : f32 to vector<8x32xf32>
    %23 = arith.select %21, %3, %22 : vector<8x32xi1>, vector<8x32xf32>
    %24 = arith.truncf %23 : vector<8x32xf32> to vector<8x32xbf16>
    %25 = arith.extf %24 : vector<8x32xbf16> to vector<8x32xf32>
    %26 = arith.subf %23, %25 : vector<8x32xf32>
    %27 = arith.truncf %26 : vector<8x32xf32> to vector<8x32xbf16>
    %cst_8 = arith.constant dense<0.000000e+00> : vector<8x128xf32>
    %28 = tpu.matmul %24, %7, %cst_8 {dimension_numbers = #tpu.dot_dimension_numbers<[1], [0], [0], [1], [0, 0, 1, 1], [], []>} : vector<8x32xbf16>, vector<32x128xbf16>, vector<8x128xf32> -> vector<8x128xf32>
    %cst_9 = arith.constant dense<0.000000e+00> : vector<8x128xf32>
    %29 = tpu.matmul %27, %7, %cst_9 {dimension_numbers = #tpu.dot_dimension_numbers<[1], [0], [0], [1], [0, 0, 1, 1], [], []>} : vector<8x32xbf16>, vector<32x128xbf16>, vector<8x128xf32> -> vector<8x128xf32>
    %30 = arith.addf %28, %29 : vector<8x128xf32>
    %31 = vector.extract_strided_slice %30 {offsets = [0, 0], sizes = [8, 1], strides = [1, 1]} : vector<8x128xf32> to vector<8x1xf32>
    %32 = math.log %18 : vector<8x1xf32>
    %33 = arith.addf %6, %32 : vector<8x1xf32>
    %34 = arith.subf %33, %31 : vector<8x1xf32>
    %cst_10 = arith.constant 0.000000e+00 : f32
    %35 = vector.broadcast %cst_10 : f32 to vector<8x1xf32>
    %36 = arith.subf %35, %34 : vector<8x1xf32>
    %37 = math.exp %36 : vector<8x1xf32>
    %cst_11 = arith.constant 1.000000e+00 : f32
    %38 = vector.broadcast %cst_11 : f32 to vector<8x1xf32>
    %39 = arith.subf %38, %37 : vector<8x1xf32>
    %40 = arith.mulf %39, %39 : vector<8x1xf32>
    %cst_12 = arith.constant 2.500000e-01 : f32
    %41 = vector.broadcast %cst_12 : f32 to vector<8x1xf32>
    %42 = arith.mulf %41, %40 : vector<8x1xf32>
    %43 = arith.mulf %42, %34 : vector<8x1xf32>
    %c0_13 = arith.constant 0 : index
    %c0_14 = arith.constant 0 : index
    %44 = vector.load %arg4[%c0_13, %c0_14] : memref<8x128xf32, #tpu.memory_space<vmem>>, vector<8x128xf32>
    %45 = vector.shape_cast %43 : vector<8x1xf32> to vector<1x8x1xf32>
    %cst_15 = arith.constant dense<0.000000e+00> : vector<1xf32>
    %46 = vector.multi_reduction <add>, %45, %cst_15 [1, 2] : vector<1x8x1xf32> to vector<1xf32>
    %47 = vector.shape_cast %46 : vector<1xf32> to vector<1x1x1xf32>
    %48 = vector.extract %47[0, 0, 0] : f32 from vector<1x1x1xf32>
    %49 = vector.broadcast %48 : f32 to vector<8x128xf32>
    %50 = arith.addf %44, %49 : vector<8x128xf32>
    %c0_16 = arith.constant 0 : index
    %c0_17 = arith.constant 0 : index
    %51 = vector.load %arg4[%c0_16, %c0_17] : memref<8x128xf32, #tpu.memory_space<vmem>>, vector<8x128xf32>
    tpu.vector_store %arg4[%c0_16, %c0_17], %50 {strides = array<i32>} : memref<8x128xf32, #tpu.memory_space<vmem>>, vector<8x128xf32>,
    return
  }
  func.func @transform_0(%arg0: i32, %arg1: i32) -> (i32, i32) {
    %c1_i32 = arith.constant 1 : i32
    %0 = arith.muli %arg0, %c1_i32 : i32
    %1 = arith.addi %0, %arg1 : i32
    %c0_i32 = arith.constant 0 : i32
    %c0_i32_0 = arith.constant 0 : i32
    return %1, %c0_i32 : i32, i32
  }
  func.func @transform_1(%arg0: i32, %arg1: i32) -> (i32, i32) {
    %c1_i32 = arith.constant 1 : i32
    %0 = arith.muli %arg0, %c1_i32 : i32
    %1 = arith.addi %0, %arg1 : i32
    %c0_i32 = arith.constant 0 : i32
    %c0_i32_0 = arith.constant 0 : i32
    return %1, %c0_i32 : i32, i32
  }
  func.func @transform_2(%arg0: i32, %arg1: i32) -> (i32, i32) {
    %c0_i32 = arith.constant 0 : i32
    %c0_i32_0 = arith.constant 0 : i32
    return %arg0, %c0_i32 : i32, i32
  }
}

</mosaic_0001>

<llo_original>
// kernel: tpu_custom_call.1
$region0: #{tpu_custom_call.1}
  #allocation0 [shape = 'u32[]', space=smem, size = 0x4, offset = 0x4, fixed_abs, tag = 'smem constant byte address 0x4 - core index']
  #allocation1 [shape = 'u32[144,128]{1,0:T(1,128)}', space=vmem, size = 0x12000, scoped, tag = 'internal scratch']
  %s0 = inlined_call_operand.vmem [shape: f32[8,32], index: 0, kind: input, shape index: {}]
  %s1 = inlined_call_operand.vmem [shape: s32[8,1], index: 1, kind: input, shape index: {}]
  %s2 = inlined_call_operand.hbm [shape: f32[8,128], index: 2, kind: output, shape index: {}]
  %s3 = sld [smem:[#allocation0]]
  $region22: #{tpu_custom_call.1} parent=0
    _
  %s5 = ssub.s32 1, %s3
  %s6 = scalar_select 0, %s5, %s3
  $region1: #{tpu_custom_call.1} parent=0
    #allocation2 [shape = 'u8[4096]{0}', space=vmem, size = 0x1000, scoped, tag = 'output window, operand 0, single buffered']
    #allocation3 [shape = 's32[1]{0}', space=sflag, size = 0x4, scoped, tag = 'scoped memory for tpu_custom_call.1']
    %7 = vsyncpa [#allocation3], 0
    // Predicated region
    $region2: #{tpu_custom_call.1} parent=1 // pred_check
      _
    $region3: #{tpu_custom_call.1} parent=1 // pred_check_branch
      %9 = sbr.rel (0) target = $region5
    $region4: #{tpu_custom_call.1} parent=1 // pred_region
      %s10 = sadd.s32 0, 0
      %p11 = scmp.lt.s32.totalorder %s10, 0
      %s12 = scalar_select %p11, %s10, 0
      %s13 = smul.addr %s12, 8
      %s14 = scalar_lea.vmem %s0, %s13
      %s15 = sadd.s32 0, 0
    $region5: #{tpu_custom_call.1} parent=1 // pred_fallthru
      _
    // Predicated region
    $region6: #{tpu_custom_call.1} parent=1 // pred_check
      _
    $region7: #{tpu_custom_call.1} parent=1 // pred_check_branch
      %17 = sbr.rel (0) target = $region9
    $region8: #{tpu_custom_call.1} parent=1 // pred_region
      %s18 = sadd.s32 0, 0
      %p19 = scmp.lt.s32.totalorder %s18, 0
      %s20 = scalar_select %p19, %s18, 0
      %s21 = smul.addr %s20, 8
      %s22 = scalar_lea.vmem %s1, %s21
      %s23 = sadd.s32 0, 0
    $region9: #{tpu_custom_call.1} parent=1 // pred_fallthru
      _
    %s24 = sadd.s32 0, 0
    %p25 = scmp.lt.s32.totalorder %s24, 0
    %s26 = scalar_select %p25, %s24, 0
    %s27 = smul.addr %s26, 8
    %s28 = scalar_lea.vmem %s0, %s27
    %s29 = sadd.s32 0, 0
    %p30 = scmp.lt.s32.totalorder %s29, 0
    %s31 = scalar_select %p30, %s29, 0
    %s32 = smul.addr %s31, 8
    %s33 = scalar_lea.vmem %s1, %s32
    %s34 = sadd.s32 0, 0
    %p35 = scmp.lt.s32.totalorder %s34, 0
    %s36 = scalar_select %p35, %s34, 0
    %s37 = smul.addr %s36, 8
    %s38 = scalar_lea.vmem %s0, %s37
    %s39 = sadd.s32 0, 0
    %s40 = sadd.s32 0, 0
    %p41 = scmp.lt.s32.totalorder %s40, 0
    %s42 = scalar_select %p41, %s40, 0
    %s43 = smul.addr %s42, 8
    %s44 = scalar_lea.vmem %s1, %s43
    %s45 = sadd.s32 0, 0
    %p48 = scmp.eq.s32.totalorder 0, 0
    // Predicated region
    $region10: #{tpu_custom_call.1} parent=1 // pred_check
      %p49 = pneg %p48
    $region11: #{tpu_custom_call.1} parent=1 // pred_check_branch
      %51 = sbr.rel (%p49) target = $region13
    $region12: #{tpu_custom_call.1} parent=1 // pred_region
      %52 = vst [vmem:[#allocation2] sm:$0xff] 0.0
    $region13: #{tpu_custom_call.1} parent=1 // pred_fallthru
      _
    %v53 = vld [vmem:[%s38] sm:$0xff]
    %v54 = vld [vmem:[%s44] sm:$0xff]
    %vm55 = vcmask 261120
    %v56 = vsel %vm55, %v53, -inf
    %57 = vmax.xlane.f32.xlu0 %v56
    %v58 = vpop.xlane.xlu0 %57
    %v59 = vsub.f32 %v53, %v58
    %v60 = vmul.f32 %v59, 1.442695
    %v61 = vpow.pop %v60
    %v62 = vpack.c.bf16 %v61, %v61
    %v63 = vunpack.c.l.bf16 %v62
    %v64 = vsub.f32 %v61, %v63
    %v65 = vpack.c.bf16 %v64, %v64
    %v67 = vsel %vm55, %v65, 0
    %69 = vmatprep.subr.bf16.mxu0 0
    %70 = vmatpush1.bf16.msra.mxu0 0
    %71 = vmatprep.subr.bf16.mxu0 0
    %72 = vmatpush1.bf16.msra.mxu0 0
    %73 = vmatprep.subr.bf16.mxu0 0
    %74 = vmatpush1.bf16.msra.mxu0 0
    %75 = vmatprep.subr.bf16.mxu0 0
    %76 = vmatpush1.bf16.msra.mxu0 0
    %77 = vmatprep.subr.bf16.mxu0 0
    %78 = vmatpush1.bf16.msra.mxu0 0
    %79 = vmatprep.subr.bf16.mxu0 0
    %80 = vmatpush1.bf16.msra.mxu0 0
    %81 = vmatprep.subr.bf16.mxu0 0
    %82 = vmatpush1.bf16.msra.mxu0 1065369472
    %83 = vmatprep.subr.bf16.mxu0 0
    %84 = vmatpush1.bf16.msra.mxu0 1065369472
    %85 = vmatprep.subr.bf16.mxu0 0
    %86 = vmatpush2.bf16.msra.mxu0 0
    %87 = vmatprep.subr.bf16.mxu0 0
    %88 = vmatpush2.bf16.msra.mxu0 0
    %89 = vmatprep.subr.bf16.mxu0 0
    %90 = vmatpush2.bf16.msra.mxu0 0
    %91 = vmatprep.subr.bf16.mxu0 0
    %92 = vmatpush2.bf16.msra.mxu0 0
    %93 = vmatprep.subr.bf16.mxu0 0
    %94 = vmatpush2.bf16.msra.mxu0 0
    %95 = vmatprep.subr.bf16.mxu0 0
    %96 = vmatpush2.bf16.msra.mxu0 0
    %97 = vmatprep.subr.bf16.mxu0 0
    %98 = vmatpush2.bf16.msra.mxu0 0
    %99 = vmatprep.subr.bf16.mxu0 0
    %100 = vmatpush2.bf16.msra.mxu0 0
    %101 = vmatprep.mubr.bf16.mxu0 0
    %102 = vmatmul.mubr.bf16.gmra.mxu0 %v67
    %v103 = vpop.f32.mrf.mxu0
    %v104 = vadd.f32 0.0, %v103
    %v105 = vpop.f32.mrf.mxu0
    %v106 = vpop.f32.mrf.mxu0
    %v107 = vpop.f32.mrf.mxu0
    %108 = vdwg.mxu0
    %v110 = vsel %vm55, %v62, 0
    %112 = vmatprep.subr.bf16.mxu0 0
    %113 = vmatpush1.bf16.msra.mxu0 0
    %114 = vmatprep.subr.bf16.mxu0 0
    %115 = vmatpush1.bf16.msra.mxu0 0
    %116 = vmatprep.subr.bf16.mxu0 0
    %117 = vmatpush1.bf16.msra.mxu0 0
    %118 = vmatprep.subr.bf16.mxu0 0
    %119 = vmatpush1.bf16.msra.mxu0 0
    %120 = vmatprep.subr.bf16.mxu0 0
    %121 = vmatpush1.bf16.msra.mxu0 0
    %122 = vmatprep.subr.bf16.mxu0 0
    %123 = vmatpush1.bf16.msra.mxu0 0
    %124 = vmatprep.subr.bf16.mxu0 0
    %125 = vmatpush1.bf16.msra.mxu0 1065369472
    %126 = vmatprep.subr.bf16.mxu0 0
    %127 = vmatpush1.bf16.msra.mxu0 1065369472
    %128 = vmatprep.subr.bf16.mxu0 0
    %129 = vmatpush2.bf16.msra.mxu0 0
    %130 = vmatprep.subr.bf16.mxu0 0
    %131 = vmatpush2.bf16.msra.mxu0 0
    %132 = vmatprep.subr.bf16.mxu0 0
    %133 = vmatpush2.bf16.msra.mxu0 0
    %134 = vmatprep.subr.bf16.mxu0 0
    %135 = vmatpush2.bf16.msra.mxu0 0
    %136 = vmatprep.subr.bf16.mxu0 0
    %137 = vmatpush2.bf16.msra.mxu0 0
    %138 = vmatprep.subr.bf16.mxu0 0
    %139 = vmatpush2.bf16.msra.mxu0 0
    %140 = vmatprep.subr.bf16.mxu0 0
    %141 = vmatpush2.bf16.msra.mxu0 0
    %142 = vmatprep.subr.bf16.mxu0 0
    %143 = vmatpush2.bf16.msra.mxu0 0
    %144 = vmatprep.mubr.bf16.mxu0 0
    %145 = vmatmul.mubr.bf16.gmra.mxu0 %v110
    %v146 = vpop.f32.mrf.mxu0
    %v147 = vadd.f32 %v104, %v146
    %v148 = vpop.f32.mrf.mxu0
    %v149 = vpop.f32.mrf.mxu0
    %v150 = vpop.f32.mrf.mxu0
    %151 = vdwg.mxu0
    %v152 = vlaneseq
    %v153 = vand.u32 %v152, 127
    %154 = vset.pattern.permute.xlu0 0
    %155 = vperm.xlu0 %154, %v54
    %v156 = vpop.permute.xlu0 %155
    %vm157 = vcmp.eq.s32.totalorder %v153, %v156
    %v158 = vsel %vm157, %v53, 0.0
    %v159 = vpack.c.bf16 %v158, %v158
    %v160 = vunpack.c.l.bf16 %v159
    %v161 = vsub.f32 %v158, %v160
    %v162 = vpack.c.bf16 %v161, %v161
    %v164 = vsel %vm55, %v162, 0
    %166 = vmatprep.subr.bf16.mxu0 0
    %167 = vmatpush1.bf16.msra.mxu0 0
    %168 = vmatprep.subr.bf16.mxu0 0
    %169 = vmatpush1.bf16.msra.mxu0 0
    %170 = vmatprep.subr.bf16.mxu0 0
    %171 = vmatpush1.bf16.msra.mxu0 0
    %172 = vmatprep.subr.bf16.mxu0 0
    %173 = vmatpush1.bf16.msra.mxu0 0
    %174 = vmatprep.subr.bf16.mxu0 0
    %175 = vmatpush1.bf16.msra.mxu0 0
    %176 = vmatprep.subr.bf16.mxu0 0
    %177 = vmatpush1.bf16.msra.mxu0 0
    %178 = vmatprep.subr.bf16.mxu0 0
    %179 = vmatpush1.bf16.msra.mxu0 1065369472
    %180 = vmatprep.subr.bf16.mxu0 0
    %181 = vmatpush1.bf16.msra.mxu0 1065369472
    %182 = vmatprep.subr.bf16.mxu0 0
    %183 = vmatpush2.bf16.msra.mxu0 0
    %184 = vmatprep.subr.bf16.mxu0 0
    %185 = vmatpush2.bf16.msra.mxu0 0
    %186 = vmatprep.subr.bf16.mxu0 0
    %187 = vmatpush2.bf16.msra.mxu0 0
    %188 = vmatprep.subr.bf16.mxu0 0
    %189 = vmatpush2.bf16.msra.mxu0 0
    %190 = vmatprep.subr.bf16.mxu0 0
    %191 = vmatpush2.bf16.msra.mxu0 0
    %192 = vmatprep.subr.bf16.mxu0 0
    %193 = vmatpush2.bf16.msra.mxu0 0
    %194 = vmatprep.subr.bf16.mxu0 0
    %195 = vmatpush2.bf16.msra.mxu0 0
    %196 = vmatprep.subr.bf16.mxu0 0
    %197 = vmatpush2.bf16.msra.mxu0 0
    %198 = vmatprep.mubr.bf16.mxu0 0
    %199 = vmatmul.mubr.bf16.gmra.mxu0 %v164
    %v200 = vpop.f32.mrf.mxu0
    %v201 = vadd.f32 0.0, %v200
    %v202 = vpop.f32.mrf.mxu0
    %v203 = vpop.f32.mrf.mxu0
    %v204 = vpop.f32.mrf.mxu0
    %205 = vdwg.mxu0
    %v207 = vsel %vm55, %v159, 0
    %209 = vmatprep.subr.bf16.mxu0 0
    %210 = vmatpush1.bf16.msra.mxu0 0
    %211 = vmatprep.subr.bf16.mxu0 0
    %212 = vmatpush1.bf16.msra.mxu0 0
    %213 = vmatprep.subr.bf16.mxu0 0
    %214 = vmatpush1.bf16.msra.mxu0 0
    %215 = vmatprep.subr.bf16.mxu0 0
    %216 = vmatpush1.bf16.msra.mxu0 0
    %217 = vmatprep.subr.bf16.mxu0 0
    %218 = vmatpush1.bf16.msra.mxu0 0
    %219 = vmatprep.subr.bf16.mxu0 0
    %220 = vmatpush1.bf16.msra.mxu0 0
    %221 = vmatprep.subr.bf16.mxu0 0
    %222 = vmatpush1.bf16.msra.mxu0 1065369472
    %223 = vmatprep.subr.bf16.mxu0 0
    %224 = vmatpush1.bf16.msra.mxu0 1065369472
    %225 = vmatprep.subr.bf16.mxu0 0
    %226 = vmatpush2.bf16.msra.mxu0 0
    %227 = vmatprep.subr.bf16.mxu0 0
    %228 = vmatpush2.bf16.msra.mxu0 0
    %229 = vmatprep.subr.bf16.mxu0 0
    %230 = vmatpush2.bf16.msra.mxu0 0
    %231 = vmatprep.subr.bf16.mxu0 0
    %232 = vmatpush2.bf16.msra.mxu0 0
    %233 = vmatprep.subr.bf16.mxu0 0
    %234 = vmatpush2.bf16.msra.mxu0 0
    %235 = vmatprep.subr.bf16.mxu0 0
    %236 = vmatpush2.bf16.msra.mxu0 0
    %237 = vmatprep.subr.bf16.mxu0 0
    %238 = vmatpush2.bf16.msra.mxu0 0
    %239 = vmatprep.subr.bf16.mxu0 0
    %240 = vmatpush2.bf16.msra.mxu0 0
    %241 = vmatprep.mubr.bf16.mxu0 0
    %242 = vmatmul.mubr.bf16.gmra.mxu0 %v207
    %v243 = vpop.f32.mrf.mxu0
    %v244 = vadd.f32 %v201, %v243
    %v245 = vpop.f32.mrf.mxu0
    %v246 = vpop.f32.mrf.mxu0
    %v247 = vpop.f32.mrf.mxu0
    %248 = vdwg.mxu0
    %v249 = vlog2.pop %v147
    %v250 = vmul.f32 %v249, 0.6931472
    %v251 = vadd.f32 %v58, %v250
    %v252 = vsub.f32 %v251, %v244
    %v253 = vsub.f32 0.0, %v252
    %v254 = vmul.f32 %v253, 1.442695
    %v255 = vpow.pop %v254
    %v256 = vsub.f32 1.0, %v255
    %v257 = vmul.f32 %v256, %v256
    %v258 = vmul.f32 %v257, 0.25
    %v259 = vmul.f32 %v258, %v252
    %v260 = vld [vmem:[#allocation2] sm:$0xff]
    %vm261 = vcmask 7168
    %v262 = vsel %vm261, %v259, 0.0
    %263 = vadd.xlane.f32.xlu0 %v262
    %v264 = vpop.xlane.xlu0 %263
    %v265 = vrot.slane %v264, 4
    %v266 = vadd.f32 %v264, %v265
    %v267 = vrot.slane %v266, 2
    %v268 = vadd.f32 %v266, %v267
    %v269 = vrot.slane %v268, 1
    %v270 = vadd.f32 %v268, %v269
    %s271 = vtos %v270
    %v272 = vstv %s271
    %v273 = vadd.f32 %v260, %v272
    %274 = vst [vmem:[#allocation2] sm:$0xff] %v273
    // Predicated region
    $region14: #{tpu_custom_call.1} parent=1 // pred_check
      _
    $region15: #{tpu_custom_call.1} parent=1 // pred_check_branch
      %276 = sbr.rel (0) target = $region17
    $region16: #{tpu_custom_call.1} parent=1 // pred_region
      %s278 = ssub.s32 128, 128
      %279 = vsyncadd [#allocation3], %s278
      %s281 = sshll.u32 [#allocation2], 4
      %s282 = int_to_ptr.vmem [resolvable:$true] %s281
      %284 = dma.vmem_to_hbm [thread:$0]  %s282, 128, %s2, [#allocation3]
    $region17: #{tpu_custom_call.1} parent=1 // pred_fallthru
      _
    // Predicated region
    $region18: #{tpu_custom_call.1} parent=1 // pred_check
      _
    $region19: #{tpu_custom_call.1} parent=1 // pred_check_branch
      %286 = sbr.rel (0) target = $region21
    $region20: #{tpu_custom_call.1} parent=1 // pred_region
      %287 = dma.done [#allocation3], 128
    $region21: #{tpu_custom_call.1} parent=1 // pred_fallthru
      _
    %288 = vsyncpa [#allocation3], 1

</llo_original>
